<compile_context>
chip_gen: v6e
topology: v6e:2x2x1
jax: 0.10.0
libtpu: 0.0.40
codegen_flags: <defaults>
</compile_context>

<pallas_src>
import functools
import math

import jax
import jax.numpy as jnp
from jax.experimental import pallas as pl
from jax.experimental.pallas import tpu as pltpu


MIB = 1024 * 1024
# Conservative per-TensorCore VMEM working-set budget.  v7x has only 64 MiB
# per TC (smallest of v5e/v6e/v7x); keep ~35% headroom for compiler scratch.
VMEM_BUDGET = 40 * MIB


def _round_up(x, m):
    return (x + m - 1) // m * m


def plan_tiles(n_nodes, in_feats, out_feats):
    """Choose padded sizes and Stage-2 tiles (tm, tn, tk); same plan works on
    v5e/v6e/v7x because the budget is derived from v7x's 64 MiB/TC VMEM."""
    # Row / reduction tile: 512 preferred (big tiles amortize the ~0.35us
    # grid-step overhead and fill the 2x256x256 MXUs on v6e/v7x); shrink for
    # tiny graphs so padding stays modest.
    base = _round_up(n_nodes, 128)
    tm = min(512, base)
    tk = tm                                    # tm == tk -> lcm is tm
    n_pad = _round_up(n_nodes, tm)

    in_pad = _round_up(in_feats, 128)          # lane-dense K for Stage 1
    out_pad = _round_up(out_feats, 128)

    # tn = out_pad whenever the f32 output/accumulator tile (double-buffered)
    # is small: the (N,N) adjacency is then streamed from HBM exactly once.
    if 2 * tm * out_pad * 4 <= 8 * MIB:
        tn = out_pad
    else:
        tn = 512
        out_pad = _round_up(out_feats, tn)

    # Resident-H panel: hold the whole (n_pad, tn) bf16 column panel of H in
    # VMEM across the i/k loops so H is read from HBM once per j.  Budget
    # assumes default double-buffering of every block.
    adj_bytes = 2 * tm * tk * 2
    out_bytes = 2 * tm * tn * 4
    panel_bytes = 2 * n_pad * tn * 2
    tile_h_bytes = 2 * tk * tn * 2
    small_bytes = 2 * (tm * 4 + tn * 4)

    resident_h = (adj_bytes + panel_bytes + out_bytes + small_bytes) <= VMEM_BUDGET
    if resident_h:
        stage2_vmem = adj_bytes + panel_bytes + out_bytes + small_bytes
    else:
        stage2_vmem = adj_bytes + tile_h_bytes + out_bytes + small_bytes
    # ~25% headroom; never below 32 MiB (raises past the v5e/v6e scoped
    # defaults, still well under v7x's 64 MiB/TC thanks to the gate above).
    stage2_vmem_limit = max(int(stage2_vmem * 1.25), 32 * MIB)

    return dict(tm=tm, tn=tn, tk=tk, n_pad=n_pad, in_pad=in_pad,
                out_pad=out_pad, resident_h=resident_h,
                stage2_vmem_limit=stage2_vmem_limit)


def prepare_adjacency(adj, n_pad):
    """Cast the exact-0/1 adjacency to bf16 (lossless) BEFORE padding, then pad
    once.  Hoisted out of gcn_layer so the padded bf16 copy is built a single
    time, not per forward call."""
    n = adj.shape[0]
    adj_bf16 = adj.astype(jnp.bfloat16)
    return jnp.pad(adj_bf16, ((0, n_pad - n), (0, n_pad - n)))


# ---------- Stage 1: H = (X @ W) * norm  (pre-normalized transformed feats) ----

def xw_norm_kernel(x_ref, w_ref, norm_ref, h_ref):
    # bf16 operands on the MXU, f32 accumulation, norm applied in f32.
    h = jnp.dot(x_ref[...], w_ref[...], preferred_element_type=jnp.float32)
    h_ref[...] = (h * norm_ref[...]).astype(h_ref.dtype)


# ---------- Stage 2: O = relu((A @ H) * norm + bias), tiled A @ H matmul -------

def prop_kernel_resident(adj_ref, h_ref, norm_ref, bias_ref, o_ref, *, tk):
    """H column panel (n_pad, tn) is VMEM-resident; slice the k-th tk-row chunk."""
    k = pl.program_id(2)

    @pl.when(k == 0)
    def _():
        o_ref[...] = jnp.zeros_like(o_ref)

    kk = pl.multiple_of(k * tk, tk)
    o_ref[...] += jnp.dot(adj_ref[...], h_ref[pl.ds(kk, tk), :],
                          preferred_element_type=jnp.float32)

    @pl.when(k == pl.num_programs(2) - 1)
    def _():
        o_ref[...] = jnp.maximum(o_ref[...] * norm_ref[...] + bias_ref[...], 0.0)


def prop_kernel_tiled(adj_ref, h_ref, norm_ref, bias_ref, o_ref):
    """Fallback: H streamed as (tk, tn) tiles when the resident panel is too big."""
    k = pl.program_id(2)

    @pl.when(k == 0)
    def _():
        o_ref[...] = jnp.zeros_like(o_ref)

    o_ref[...] += jnp.dot(adj_ref[...], h_ref[...],
                          preferred_element_type=jnp.float32)

    @pl.when(k == pl.num_programs(2) - 1)
    def _():
        o_ref[...] = jnp.maximum(o_ref[...] * norm_ref[...] + bias_ref[...], 0.0)


def gcn_layer(x, w, adj_pad_bf16, norm, bias, cfg):
    """GCN layer forward (eval mode).
    x:(N,in)  w:(in,out)  adj_pad_bf16:(n_pad,n_pad) padded bf16 0/1 adjacency
    norm:(N,1)  bias:(1,out).  Returns (N,out) f32."""
    N, in_feats = x.shape
    out_feats = w.shape[1]
    tm, tn, tk = cfg["tm"], cfg["tn"], cfg["tk"]
    n_pad, in_pad, out_pad = cfg["n_pad"], cfg["in_pad"], cfg["out_pad"]

    # bf16 operands for Stage 1 (H is stored bf16 anyway -> rounding in the noise).
    x_p = jnp.zeros((n_pad, in_pad), jnp.bfloat16).at[:N, :in_feats].set(
        x.astype(jnp.bfloat16))
    w_p = jnp.zeros((in_pad, out_pad), jnp.bfloat16).at[:in_feats, :out_feats].set(
        w.astype(jnp.bfloat16))
    b_p = jnp.zeros((1, out_pad), jnp.float32).at[:, :out_feats].set(bias)
    norm_p = jnp.zeros((n_pad, 1), jnp.float32).at[:N].set(norm)

    # ---- Stage 1: compute H once, emitted bf16 for Stage 2 ----
    # Tile W along out_feats only when the full-W block would be large.
    tn1 = out_pad if in_pad * out_pad * 2 <= 8 * MIB else tn
    h = pl.pallas_call(
        xw_norm_kernel,
        out_shape=jax.ShapeDtypeStruct((n_pad, out_pad), jnp.bfloat16),
        grid_spec=pltpu.PrefetchScalarGridSpec(
            num_scalar_prefetch=0,
            grid=(n_pad // tm, out_pad // tn1),
            in_specs=[
                pl.BlockSpec((tm, in_pad), lambda i, j: (i, 0)),
                pl.BlockSpec((in_pad, tn1), lambda i, j: (0, j)),
                pl.BlockSpec((tm, 1), lambda i, j: (i, 0)),
            ],
            out_specs=pl.BlockSpec((tm, tn1), lambda i, j: (i, j)),
        ),
        compiler_params=pltpu.CompilerParams(
            dimension_semantics=("parallel", "parallel"),
            vmem_limit_bytes=32 * MIB),
    )(x_p, w_p, norm_p)

    # ---- Stage 2: tiled, pipelined A @ H accumulating into the f32 output ----
    grid = (n_pad // tm, out_pad // tn, n_pad // tk)
    h_hbm_reads = 1 if cfg["resident_h"] else (n_pad // tm)
    cost = pl.CostEstimate(
        flops=2 * n_pad * n_pad * out_pad,
        transcendentals=0,
        bytes_accessed=(adj_pad_bf16.size * 2
                        + h_hbm_reads * n_pad * out_pad * 2
                        + n_pad * out_pad * 4 + n_pad * 4 + out_pad * 4),
    )

    if cfg["resident_h"]:
        kernel = functools.partial(prop_kernel_resident, tk=tk)
        h_spec = pl.BlockSpec((n_pad, tn), lambda i, j, k: (0, j))   # resident panel
    else:
        kernel = prop_kernel_tiled
        h_spec = pl.BlockSpec((tk, tn), lambda i, j, k: (k, j))      # streamed tile

    out = pl.pallas_call(
        kernel,
        out_shape=jax.ShapeDtypeStruct((n_pad, out_pad), jnp.float32),
        grid_spec=pltpu.PrefetchScalarGridSpec(
            num_scalar_prefetch=0,
            grid=grid,
            in_specs=[
                pl.BlockSpec((tm, tk), lambda i, j, k: (i, k)),   # adjacency tile
                h_spec,                                           # H panel / tile
                pl.BlockSpec((tm, 1), lambda i, j, k: (i, 0)),    # post-norm (row)
                pl.BlockSpec((1, tn), lambda i, j, k: (0, j)),    # bias
            ],
            out_specs=pl.BlockSpec((tm, tn), lambda i, j, k: (i, j)),
        ),
        compiler_params=pltpu.CompilerParams(
            dimension_semantics=("parallel", "parallel", "arbitrary"),
            vmem_limit_bytes=cfg["stage2_vmem_limit"]),
        cost_estimate=cost,
    )(adj_pad_bf16, h, norm_p, b_p)

    return out[:N, :out_feats]


if __name__ == "__main__":
    key = jax.random.PRNGKey(0)
    k_x, k_w, k_b, k_adj = jax.random.split(key, 4)

    # Small shapes consistent with the module
    N = 256
    in_feats = 64
    out_feats = 32

    # Node features
    x = jax.random.normal(k_x, (N, in_feats), dtype=jnp.float32)

    # Deterministic parameter init: uniform(-stdv, stdv), stdv = 1/sqrt(out_feats)
    stdv = 1.0 / math.sqrt(out_feats)
    w = jax.random.uniform(k_w, (in_feats, out_feats), jnp.float32, -stdv, stdv)
    bias = jax.random.uniform(k_b, (1, out_feats), jnp.float32, -stdv, stdv)

    # Deterministic random graph: symmetric binary adjacency with self-loops
    a_rand = jax.random.uniform(k_adj, (N, N), jnp.float32)
    adj = (a_rand + a_rand.T > 1.4).astype(jnp.float32)
    adj = jnp.maximum(adj, jnp.eye(N, dtype=jnp.float32))   # self-loops

    # Symmetric GCN normalization: norm_i = deg_i^{-1/2}
    deg = jnp.sum(adj, axis=1, keepdims=True)               # (N, 1)
    norm = 1.0 / jnp.sqrt(deg)

    # Plan tiles + build the padded bf16 adjacency ONCE (hoisted out of the call).
    cfg = plan_tiles(N, in_feats, out_feats)
    adj_pad = prepare_adjacency(adj, cfg["n_pad"])

    out = gcn_layer(x, w, adj_pad, norm, bias, cfg)
    out = jax.block_until_ready(out)

    # Reference with matching bf16 operand casts
    x_bf = x.astype(jnp.bfloat16)
    w_bf = w.astype(jnp.bfloat16)
    h_ref = (jnp.dot(x_bf, w_bf, preferred_element_type=jnp.float32) * norm
             ).astype(jnp.bfloat16)
    prop = jnp.dot(adj.astype(jnp.bfloat16), h_ref,
                   preferred_element_type=jnp.float32)
    ref = jnp.maximum(prop * norm + bias, 0.0)
    assert jnp.allclose(out, ref, atol=5e-3, rtol=5e-3), "mismatch vs bf16 reference"

    # Loose sanity check against the pure-f32 math (bf16 cast error bounded)
    ref_f32 = jnp.maximum((adj @ ((x @ w) * norm)) * norm + bias, 0.0)
    assert jnp.allclose(out, ref_f32, atol=3e-2, rtol=3e-2), "mismatch vs f32 reference"

    print("KERNEL_OK")
</pallas_src>

<mosaic_0001>
module attributes {stable_mosaic.version = 11 : i64} {
  func.func @xw_norm_kernel(%arg0: i32, %arg1: i32, %arg2: memref<256x128xbf16, #tpu.memory_space<vmem>>, %arg3: memref<128x128xbf16, #tpu.memory_space<vmem>>, %arg4: memref<256x1xf32, #tpu.memory_space<vmem>>, %arg5: memref<256x128xbf16, #tpu.memory_space<vmem>>) attributes {dimension_semantics = [#tpu.dimension_semantics<parallel>, #tpu.dimension_semantics<parallel>], iteration_bounds = array<i64: 1, 1>, scalar_prefetch = 0 : i64, scratch_operands = 0 : i64, tpu.core_type = #tpu.core_type<tc>, window_params = [{transform_indices = @transform_0, window_bounds = array<i64: 256, 128>}, {transform_indices = @transform_1, window_bounds = array<i64: 128, 128>}, {transform_indices = @transform_2, window_bounds = array<i64: 256, 1>}, {transform_indices = @transform_3, window_bounds = array<i64: 256, 128>}]} {
    %c0 = arith.constant 0 : index
    %c0_0 = arith.constant 0 : index
    %0 = vector.load %arg2[%c0, %c0_0] : memref<256x128xbf16, #tpu.memory_space<vmem>>, vector<256x128xbf16>
    %c0_1 = arith.constant 0 : index
    %c0_2 = arith.constant 0 : index
    %1 = vector.load %arg3[%c0_1, %c0_2] : memref<128x128xbf16, #tpu.memory_space<vmem>>, vector<128x128xbf16>
    %cst = arith.constant dense<0.000000e+00> : vector<256x128xf32>
    %2 = tpu.matmul %0, %1, %cst {dimension_numbers = #tpu.dot_dimension_numbers<[1], [0], [0], [1], [0, 0, 1, 1], [], []>} : vector<256x128xbf16>, vector<128x128xbf16>, vector<256x128xf32> -> vector<256x128xf32>
    %c0_3 = arith.constant 0 : index
    %c0_4 = arith.constant 0 : index
    %3 = vector.load %arg4[%c0_3, %c0_4] : memref<256x1xf32, #tpu.memory_space<vmem>>, vector<256x1xf32>
    %4 = vector.broadcast %3 : vector<256x1xf32> to vector<256x128xf32>
    %5 = arith.mulf %2, %4 : vector<256x128xf32>
    %6 = arith.truncf %5 : vector<256x128xf32> to vector<256x128xbf16>
    %c0_5 = arith.constant 0 : index
    %c0_6 = arith.constant 0 : index
    %7 = vector.load %arg5[%c0_5, %c0_6] : memref<256x128xbf16, #tpu.memory_space<vmem>>, vector<256x128xbf16>
    tpu.vector_store %arg5[%c0_5, %c0_6], %6 {strides = array<i32>} : memref<256x128xbf16, #tpu.memory_space<vmem>>, vector<256x128xbf16>,
    return
  }
  func.func @transform_0(%arg0: i32, %arg1: i32) -> (i32, i32) {
    %c0_i32 = arith.constant 0 : i32
    %c0_i32_0 = arith.constant 0 : i32
    return %arg0, %c0_i32 : i32, i32
  }
  func.func @transform_1(%arg0: i32, %arg1: i32) -> (i32, i32) {
    %c0_i32 = arith.constant 0 : i32
    %c0_i32_0 = arith.constant 0 : i32
    return %c0_i32, %arg1 : i32, i32
  }
  func.func @transform_2(%arg0: i32, %arg1: i32) -> (i32, i32) {
    %c0_i32 = arith.constant 0 : i32
    %c0_i32_0 = arith.constant 0 : i32
    return %arg0, %c0_i32 : i32, i32
  }
  func.func @transform_3(%arg0: i32, %arg1: i32) -> (i32, i32) {
    %c0_i32 = arith.constant 0 : i32
    return %arg0, %arg1 : i32, i32
  }
}

</mosaic_0001>

<llo_original>
// kernel: tpu_custom_call.1
$region0: #{tpu_custom_call.1}
  #allocation0 [shape = 'u32[]', space=smem, size = 0x4, offset = 0x4, fixed_abs, tag = 'smem constant byte address 0x4 - core index']
  #allocation1 [shape = 'u32[144,128]{1,0:T(1,128)}', space=vmem, size = 0x12000, scoped, tag = 'internal scratch']
  %s0 = inlined_call_operand.vmem [shape: bf16[256,128], index: 0, kind: input, shape index: {}]
  %s1 = inlined_call_operand.vmem [shape: bf16[128,128], index: 1, kind: input, shape index: {}]
  %s2 = inlined_call_operand.vmem [shape: f32[256,1], index: 2, kind: input, shape index: {}]
  %s3 = inlined_call_operand.hbm [shape: bf16[256,128], index: 3, kind: output, shape index: {}]
  %s4 = sld [smem:[#allocation0]]
  $region22: #{tpu_custom_call.1} parent=0
    _
  %s6 = ssub.s32 1, %s4
  %s7 = scalar_select 0, %s6, %s4
  $region1: #{tpu_custom_call.1} parent=0
    #allocation2 [shape = 'u8[65536]{0}', space=vmem, size = 0x10000, scoped, tag = 'output window, operand 0, single buffered']
    #allocation3 [shape = 's32[1]{0}', space=sflag, size = 0x4, scoped, tag = 'scoped memory for tpu_custom_call.1']
    %8 = vsyncpa [#allocation3], 0
    // Predicated region
    $region2: #{tpu_custom_call.1} parent=1 // pred_check
      _
    $region3: #{tpu_custom_call.1} parent=1 // pred_check_branch
      %10 = sbr.rel (0) target = $region5
    $region4: #{tpu_custom_call.1} parent=1 // pred_region
      _
    $region5: #{tpu_custom_call.1} parent=1 // pred_fallthru
      _
    // Predicated region
    $region6: #{tpu_custom_call.1} parent=1 // pred_check
      _
    $region7: #{tpu_custom_call.1} parent=1 // pred_check_branch
      %12 = sbr.rel (0) target = $region9
    $region8: #{tpu_custom_call.1} parent=1 // pred_region
      _
    $region9: #{tpu_custom_call.1} parent=1 // pred_fallthru
      _
    // Predicated region
    $region10: #{tpu_custom_call.1} parent=1 // pred_check
      _
    $region11: #{tpu_custom_call.1} parent=1 // pred_check_branch
      %14 = sbr.rel (0) target = $region13
    $region12: #{tpu_custom_call.1} parent=1 // pred_region
      _
    $region13: #{tpu_custom_call.1} parent=1 // pred_fallthru
      _
    %v16 = vld [vmem:[%s0] sm:$0xf]
    %v17 = vld [vmem:[%s0 + $0x4] sm:$0xf]
    %v18 = vld [vmem:[%s0 + $0x8] sm:$0xf]
    %v19 = vld [vmem:[%s0 + $0xc] sm:$0xf]
    %v20 = vld [vmem:[%s0 + $0x10] sm:$0xf]
    %v21 = vld [vmem:[%s0 + $0x14] sm:$0xf]
    %v22 = vld [vmem:[%s0 + $0x18] sm:$0xf]
    %v23 = vld [vmem:[%s0 + $0x1c] sm:$0xf]
    %v24 = vld [vmem:[%s0 + $0x20] sm:$0xf]
    %v25 = vld [vmem:[%s0 + $0x24] sm:$0xf]
    %v26 = vld [vmem:[%s0 + $0x28] sm:$0xf]
    %v27 = vld [vmem:[%s0 + $0x2c] sm:$0xf]
    %v28 = vld [vmem:[%s0 + $0x30] sm:$0xf]
    %v29 = vld [vmem:[%s0 + $0x34] sm:$0xf]
    %v30 = vld [vmem:[%s0 + $0x38] sm:$0xf]
    %v31 = vld [vmem:[%s0 + $0x3c] sm:$0xf]
    %v32 = vld [vmem:[%s0 + $0x40] sm:$0xf]
    %v33 = vld [vmem:[%s0 + $0x44] sm:$0xf]
    %v34 = vld [vmem:[%s0 + $0x48] sm:$0xf]
    %v35 = vld [vmem:[%s0 + $0x4c] sm:$0xf]
    %v36 = vld [vmem:[%s0 + $0x50] sm:$0xf]
    %v37 = vld [vmem:[%s0 + $0x54] sm:$0xf]
    %v38 = vld [vmem:[%s0 + $0x58] sm:$0xf]
    %v39 = vld [vmem:[%s0 + $0x5c] sm:$0xf]
    %v40 = vld [vmem:[%s0 + $0x60] sm:$0xf]
    %v41 = vld [vmem:[%s0 + $0x64] sm:$0xf]
    %v42 = vld [vmem:[%s0 + $0x68] sm:$0xf]
    %v43 = vld [vmem:[%s0 + $0x6c] sm:$0xf]
    %v44 = vld [vmem:[%s0 + $0x70] sm:$0xf]
    %v45 = vld [vmem:[%s0 + $0x74] sm:$0xf]
    %v46 = vld [vmem:[%s0 + $0x78] sm:$0xf]
    %v47 = vld [vmem:[%s0 + $0x7c] sm:$0xf]
    %v48 = vld [vmem:[%s1] sm:$0xf]
    %v49 = vld [vmem:[%s1 + $0x4] sm:$0xf]
    %v50 = vld [vmem:[%s1 + $0x8] sm:$0xf]
    %v51 = vld [vmem:[%s1 + $0xc] sm:$0xf]
    %v52 = vld [vmem:[%s1 + $0x10] sm:$0xf]
    %v53 = vld [vmem:[%s1 + $0x14] sm:$0xf]
    %v54 = vld [vmem:[%s1 + $0x18] sm:$0xf]
    %v55 = vld [vmem:[%s1 + $0x1c] sm:$0xf]
    %v56 = vld [vmem:[%s1 + $0x20] sm:$0xf]
    %v57 = vld [vmem:[%s1 + $0x24] sm:$0xf]
    %v58 = vld [vmem:[%s1 + $0x28] sm:$0xf]
    %v59 = vld [vmem:[%s1 + $0x2c] sm:$0xf]
    %v60 = vld [vmem:[%s1 + $0x30] sm:$0xf]
    %v61 = vld [vmem:[%s1 + $0x34] sm:$0xf]
    %v62 = vld [vmem:[%s1 + $0x38] sm:$0xf]
    %v63 = vld [vmem:[%s1 + $0x3c] sm:$0xf]
    %v96 = vunpack.c.l.b16 %v16
    %v97 = vunpack.c.l.b16 %v17
    %v98 = vunpack.c.l.b16 %v18
    %v99 = vunpack.c.l.b16 %v19
    %v100 = vunpack.c.l.b16 %v20
    %v101 = vunpack.c.l.b16 %v21
    %v102 = vunpack.c.l.b16 %v22
    %v103 = vunpack.c.l.b16 %v23
    %v104 = vunpack.c.l.b16 %v24
    %v105 = vunpack.c.l.b16 %v25
    %v106 = vunpack.c.l.b16 %v26
    %v107 = vunpack.c.l.b16 %v27
    %v108 = vunpack.c.l.b16 %v28
    %v109 = vunpack.c.l.b16 %v29
    %v110 = vunpack.c.l.b16 %v30
    %v111 = vunpack.c.l.b16 %v31
    %v112 = vunpack.c.l.b16 %v32
    %v113 = vunpack.c.l.b16 %v33
    %v114 = vunpack.c.l.b16 %v34
    %v115 = vunpack.c.l.b16 %v35
    %v116 = vunpack.c.l.b16 %v36
    %v117 = vunpack.c.l.b16 %v37
    %v118 = vunpack.c.l.b16 %v38
    %v119 = vunpack.c.l.b16 %v39
    %v120 = vunpack.c.l.b16 %v40
    %v121 = vunpack.c.l.b16 %v41
    %v122 = vunpack.c.l.b16 %v42
    %v123 = vunpack.c.l.b16 %v43
    %v124 = vunpack.c.l.b16 %v44
    %v125 = vunpack.c.l.b16 %v45
    %v126 = vunpack.c.l.b16 %v46
    %v127 = vunpack.c.l.b16 %v47
    %v128 = vpack.c.b16 %v97, %v96
    %v129 = vpack.c.b16 %v99, %v98
    %v130 = vpack.c.b16 %v101, %v100
    %v131 = vpack.c.b16 %v103, %v102
    %v132 = vpack.c.b16 %v105, %v104
    %v133 = vpack.c.b16 %v107, %v106
    %v134 = vpack.c.b16 %v109, %v108
    %v135 = vpack.c.b16 %v111, %v110
    %v136 = vpack.c.b16 %v113, %v112
    %v137 = vpack.c.b16 %v115, %v114
    %v138 = vpack.c.b16 %v117, %v116
    %v139 = vpack.c.b16 %v119, %v118
    %v140 = vpack.c.b16 %v121, %v120
    %v141 = vpack.c.b16 %v123, %v122
    %v142 = vpack.c.b16 %v125, %v124
    %v143 = vpack.c.b16 %v127, %v126
    %v176 = vunpack.c.l.b16 %v48
    %v177 = vunpack.c.l.b16 %v49
    %v178 = vunpack.c.l.b16 %v50
    %v179 = vunpack.c.l.b16 %v51
    %v180 = vunpack.c.l.b16 %v52
    %v181 = vunpack.c.l.b16 %v53
    %v182 = vunpack.c.l.b16 %v54
    %v183 = vunpack.c.l.b16 %v55
    %v184 = vunpack.c.l.b16 %v56
    %v185 = vunpack.c.l.b16 %v57
    %v186 = vunpack.c.l.b16 %v58
    %v187 = vunpack.c.l.b16 %v59
    %v188 = vunpack.c.l.b16 %v60
    %v189 = vunpack.c.l.b16 %v61
    %v190 = vunpack.c.l.b16 %v62
    %v191 = vunpack.c.l.b16 %v63
    %v192 = vpack.c.b16 %v177, %v176
    %v193 = vpack.c.b16 %v179, %v178
    %v194 = vpack.c.b16 %v181, %v180
    %v195 = vpack.c.b16 %v183, %v182
    %v196 = vpack.c.b16 %v185, %v184
    %v197 = vpack.c.b16 %v187, %v186
    %v198 = vpack.c.b16 %v189, %v188
    %v199 = vpack.c.b16 %v191, %v190
    %208 = vmatprep.subr.bf16.mxu0 0
    %209 = vmatpush1.bf16.msra.mxu0 %v199
    %210 = vmatprep.subr.bf16.mxu0 0
    %211 = vmatpush1.bf16.msra.mxu0 %v198
    %212 = vmatprep.subr.bf16.mxu0 0
    %213 = vmatpush1.bf16.msra.mxu0 %v197
    %214 = vmatprep.subr.bf16.mxu0 0
    %215 = vmatpush1.bf16.msra.mxu0 %v196
    %216 = vmatprep.subr.bf16.mxu0 0
    %217 = vmatpush1.bf16.msra.mxu0 %v195
    %218 = vmatprep.subr.bf16.mxu0 0
    %219 = vmatpush1.bf16.msra.mxu0 %v194
    %220 = vmatprep.subr.bf16.mxu0 0
    %221 = vmatpush1.bf16.msra.mxu0 %v193
    %222 = vmatprep.subr.bf16.mxu0 0
    %223 = vmatpush1.bf16.msra.mxu0 %v192
    %224 = vmatprep.subr.bf16.mxu0 0
    %225 = vmatpush2.bf16.msra.mxu0 0
    %226 = vmatprep.subr.bf16.mxu0 0
    %227 = vmatpush2.bf16.msra.mxu0 0
    %228 = vmatprep.subr.bf16.mxu0 0
    %229 = vmatpush2.bf16.msra.mxu0 0
    %230 = vmatprep.subr.bf16.mxu0 0
    %231 = vmatpush2.bf16.msra.mxu0 0
    %232 = vmatprep.subr.bf16.mxu0 0
    %233 = vmatpush2.bf16.msra.mxu0 0
    %234 = vmatprep.subr.bf16.mxu0 0
    %235 = vmatpush2.bf16.msra.mxu0 0
    %236 = vmatprep.subr.bf16.mxu0 0
    %237 = vmatpush2.bf16.msra.mxu0 0
    %238 = vmatprep.subr.bf16.mxu0 0
    %239 = vmatpush2.bf16.msra.mxu0 0
    %240 = vmatprep.mubr.bf16.mxu0 0
    %241 = vmatmul.mubr.bf16.gmra.mxu0 %v128
    %v242 = vpop.f32.mrf.mxu0
    %v243 = vadd.f32 0.0, %v242
    %v244 = vpop.f32.mrf.mxu0
    %v245 = vpop.f32.mrf.mxu0
    %v246 = vadd.f32 0.0, %v245
    %v247 = vpop.f32.mrf.mxu0
    %248 = vmatprep.mubr.bf16.mxu0 0
    %249 = vmatmul.mubr.bf16.gmra.mxu0 %v129
    %v250 = vpop.f32.mrf.mxu0
    %v251 = vadd.f32 0.0, %v250
    %v252 = vpop.f32.mrf.mxu0
    %v253 = vpop.f32.mrf.mxu0
    %v254 = vadd.f32 0.0, %v253
    %v255 = vpop.f32.mrf.mxu0
    %256 = vmatprep.mubr.bf16.mxu0 0
    %257 = vmatmul.mubr.bf16.gmra.mxu0 %v130
    %v258 = vpop.f32.mrf.mxu0
    %v259 = vadd.f32 0.0, %v258
    %v260 = vpop.f32.mrf.mxu0
    %v261 = vpop.f32.mrf.mxu0
    %v262 = vadd.f32 0.0, %v261
    %v263 = vpop.f32.mrf.mxu0
    %264 = vmatprep.mubr.bf16.mxu0 0
    %265 = vmatmul.mubr.bf16.gmra.mxu0 %v131
    %v266 = vpop.f32.mrf.mxu0
    %v267 = vadd.f32 0.0, %v266
    %v268 = vpop.f32.mrf.mxu0
    %v269 = vpop.f32.mrf.mxu0
    %v270 = vadd.f32 0.0, %v269
    %v271 = vpop.f32.mrf.mxu0
    %272 = vmatprep.mubr.bf16.mxu0 0
    %273 = vmatmul.mubr.bf16.gmra.mxu0 %v132
    %v274 = vpop.f32.mrf.mxu0
    %v275 = vadd.f32 0.0, %v274
    %v276 = vpop.f32.mrf.mxu0
    %v277 = vpop.f32.mrf.mxu0
    %v278 = vadd.f32 0.0, %v277
    %v279 = vpop.f32.mrf.mxu0
    %280 = vmatprep.mubr.bf16.mxu0 0
    %281 = vmatmul.mubr.bf16.gmra.mxu0 %v133
    %v282 = vpop.f32.mrf.mxu0
    %v283 = vadd.f32 0.0, %v282
    %v284 = vpop.f32.mrf.mxu0
    %v285 = vpop.f32.mrf.mxu0
    %v286 = vadd.f32 0.0, %v285
    %v287 = vpop.f32.mrf.mxu0
    %288 = vmatprep.mubr.bf16.mxu0 0
    %289 = vmatmul.mubr.bf16.gmra.mxu0 %v134
    %v290 = vpop.f32.mrf.mxu0
    %v291 = vadd.f32 0.0, %v290
    %v292 = vpop.f32.mrf.mxu0
    %v293 = vpop.f32.mrf.mxu0
    %v294 = vadd.f32 0.0, %v293
    %v295 = vpop.f32.mrf.mxu0
    %296 = vmatprep.mubr.bf16.mxu0 0
    %297 = vmatmul.mubr.bf16.gmra.mxu0 %v135
    %v298 = vpop.f32.mrf.mxu0
    %v299 = vadd.f32 0.0, %v298
    %v300 = vpop.f32.mrf.mxu0
    %v301 = vpop.f32.mrf.mxu0
    %v302 = vadd.f32 0.0, %v301
    %v303 = vpop.f32.mrf.mxu0
    %304 = vmatprep.mubr.bf16.mxu0 0
    %305 = vmatmul.mubr.bf16.gmra.mxu0 %v136
    %v306 = vpop.f32.mrf.mxu0
    %v307 = vadd.f32 0.0, %v306
    %v308 = vpop.f32.mrf.mxu0
    %v309 = vpop.f32.mrf.mxu0
    %v310 = vadd.f32 0.0, %v309
    %v311 = vpop.f32.mrf.mxu0
    %312 = vmatprep.mubr.bf16.mxu0 0
    %313 = vmatmul.mubr.bf16.gmra.mxu0 %v137
    %v314 = vpop.f32.mrf.mxu0
    %v315 = vadd.f32 0.0, %v314
    %v316 = vpop.f32.mrf.mxu0
    %v317 = vpop.f32.mrf.mxu0
    %v318 = vadd.f32 0.0, %v317
    %v319 = vpop.f32.mrf.mxu0
    %320 = vmatprep.mubr.bf16.mxu0 0
    %321 = vmatmul.mubr.bf16.gmra.mxu0 %v138
    %v322 = vpop.f32.mrf.mxu0
    %v323 = vadd.f32 0.0, %v322
    %v324 = vpop.f32.mrf.mxu0
    %v325 = vpop.f32.mrf.mxu0
    %v326 = vadd.f32 0.0, %v325
    %v327 = vpop.f32.mrf.mxu0
    %328 = vmatprep.mubr.bf16.mxu0 0
    %329 = vmatmul.mubr.bf16.gmra.mxu0 %v139
    %v330 = vpop.f32.mrf.mxu0
    %v331 = vadd.f32 0.0, %v330
    %v332 = vpop.f32.mrf.mxu0
    %v333 = vpop.f32.mrf.mxu0
    %v334 = vadd.f32 0.0, %v333
    %v335 = vpop.f32.mrf.mxu0
    %336 = vmatprep.mubr.bf16.mxu0 0
    %337 = vmatmul.mubr.bf16.gmra.mxu0 %v140
    %v338 = vpop.f32.mrf.mxu0
    %v339 = vadd.f32 0.0, %v338
    %v340 = vpop.f32.mrf.mxu0
    %v341 = vpop.f32.mrf.mxu0
    %v342 = vadd.f32 0.0, %v341
    %v343 = vpop.f32.mrf.mxu0
    %344 = vmatprep.mubr.bf16.mxu0 0
    %345 = vmatmul.mubr.bf16.gmra.mxu0 %v141
    %v346 = vpop.f32.mrf.mxu0
    %v347 = vadd.f32 0.0, %v346
    %v348 = vpop.f32.mrf.mxu0
    %v349 = vpop.f32.mrf.mxu0
    %v350 = vadd.f32 0.0, %v349
    %v351 = vpop.f32.mrf.mxu0
    %352 = vmatprep.mubr.bf16.mxu0 0
    %353 = vmatmul.mubr.bf16.gmra.mxu0 %v142
    %v354 = vpop.f32.mrf.mxu0
    %v355 = vadd.f32 0.0, %v354
    %v356 = vpop.f32.mrf.mxu0
    %v357 = vpop.f32.mrf.mxu0
    %v358 = vadd.f32 0.0, %v357
    %v359 = vpop.f32.mrf.mxu0
    %360 = vmatprep.mubr.bf16.mxu0 0
    %361 = vmatmul.mubr.bf16.gmra.mxu0 %v143
    %v362 = vpop.f32.mrf.mxu0
    %v363 = vadd.f32 0.0, %v362
    %v364 = vpop.f32.mrf.mxu0
    %v365 = vpop.f32.mrf.mxu0
    %v366 = vadd.f32 0.0, %v365
    %v367 = vpop.f32.mrf.mxu0
    %368 = vdwg.mxu0
    %v369 = vld [vmem:[%s2] sm:$0xff]
    %v370 = vld [vmem:[%s2 + $0x8] sm:$0xff]
    %v371 = vld [vmem:[%s2 + $0x10] sm:$0xff]
    %v372 = vld [vmem:[%s2 + $0x18] sm:$0xff]
    %v373 = vld [vmem:[%s2 + $0x20] sm:$0xff]
    %v374 = vld [vmem:[%s2 + $0x28] sm:$0xff]
    %v375 = vld [vmem:[%s2 + $0x30] sm:$0xff]
    %v376 = vld [vmem:[%s2 + $0x38] sm:$0xff]
    %v377 = vld [vmem:[%s2 + $0x40] sm:$0xff]
    %v378 = vld [vmem:[%s2 + $0x48] sm:$0xff]
    %v379 = vld [vmem:[%s2 + $0x50] sm:$0xff]
    %v380 = vld [vmem:[%s2 + $0x58] sm:$0xff]
    %v381 = vld [vmem:[%s2 + $0x60] sm:$0xff]
    %v382 = vld [vmem:[%s2 + $0x68] sm:$0xff]
    %v383 = vld [vmem:[%s2 + $0x70] sm:$0xff]
    %v384 = vld [vmem:[%s2 + $0x78] sm:$0xff]
    %v385 = vld [vmem:[%s2 + $0x80] sm:$0xff]
    %v386 = vld [vmem:[%s2 + $0x88] sm:$0xff]
    %v387 = vld [vmem:[%s2 + $0x90] sm:$0xff]
    %v388 = vld [vmem:[%s2 + $0x98] sm:$0xff]
    %v389 = vld [vmem:[%s2 + $0xa0] sm:$0xff]
    %v390 = vld [vmem:[%s2 + $0xa8] sm:$0xff]
    %v391 = vld [vmem:[%s2 + $0xb0] sm:$0xff]
    %v392 = vld [vmem:[%s2 + $0xb8] sm:$0xff]
    %v393 = vld [vmem:[%s2 + $0xc0] sm:$0xff]
    %v394 = vld [vmem:[%s2 + $0xc8] sm:$0xff]
    %v395 = vld [vmem:[%s2 + $0xd0] sm:$0xff]
    %v396 = vld [vmem:[%s2 + $0xd8] sm:$0xff]
    %v397 = vld [vmem:[%s2 + $0xe0] sm:$0xff]
    %v398 = vld [vmem:[%s2 + $0xe8] sm:$0xff]
    %v399 = vld [vmem:[%s2 + $0xf0] sm:$0xff]
    %v400 = vld [vmem:[%s2 + $0xf8] sm:$0xff]
    %402 = vset.pattern.permute.xlu0 0
    %403 = vperm.xlu0 %402, %v369
    %v404 = vpop.permute.xlu0 %403
    %407 = vset.pattern.permute.xlu0 0
    %408 = vperm.xlu0 %407, %v370
    %v409 = vpop.permute.xlu0 %408
    %412 = vset.pattern.permute.xlu0 0
    %413 = vperm.xlu0 %412, %v371
    %v414 = vpop.permute.xlu0 %413
    %417 = vset.pattern.permute.xlu0 0
    %418 = vperm.xlu0 %417, %v372
    %v419 = vpop.permute.xlu0 %418
    %422 = vset.pattern.permute.xlu0 0
    %423 = vperm.xlu0 %422, %v373
    %v424 = vpop.permute.xlu0 %423
    %427 = vset.pattern.permute.xlu0 0
    %428 = vperm.xlu0 %427, %v374
    %v429 = vpop.permute.xlu0 %428
    %432 = vset.pattern.permute.xlu0 0
    %433 = vperm.xlu0 %432, %v375
    %v434 = vpop.permute.xlu0 %433
    %437 = vset.pattern.permute.xlu0 0
    %438 = vperm.xlu0 %437, %v376
    %v439 = vpop.permute.xlu0 %438
    %442 = vset.pattern.permute.xlu0 0
    %443 = vperm.xlu0 %442, %v377
    %v444 = vpop.permute.xlu0 %443
    %447 = vset.pattern.permute.xlu0 0
    %448 = vperm.xlu0 %447, %v378
    %v449 = vpop.permute.xlu0 %448
    %452 = vset.pattern.permute.xlu0 0
    %453 = vperm.xlu0 %452, %v379
    %v454 = vpop.permute.xlu0 %453
    %457 = vset.pattern.permute.xlu0 0
    %458 = vperm.xlu0 %457, %v380
    %v459 = vpop.permute.xlu0 %458
    %462 = vset.pattern.permute.xlu0 0
    %463 = vperm.xlu0 %462, %v381
    %v464 = vpop.permute.xlu0 %463
    %467 = vset.pattern.permute.xlu0 0
    %468 = vperm.xlu0 %467, %v382
    %v469 = vpop.permute.xlu0 %468
    %472 = vset.pattern.permute.xlu0 0
    %473 = vperm.xlu0 %472, %v383
    %v474 = vpop.permute.xlu0 %473
    %477 = vset.pattern.permute.xlu0 0
    %478 = vperm.xlu0 %477, %v384
    %v479 = vpop.permute.xlu0 %478
    %482 = vset.pattern.permute.xlu0 0
    %483 = vperm.xlu0 %482, %v385
    %v484 = vpop.permute.xlu0 %483
    %487 = vset.pattern.permute.xlu0 0
    %488 = vperm.xlu0 %487, %v386
    %v489 = vpop.permute.xlu0 %488
    %492 = vset.pattern.permute.xlu0 0
    %493 = vperm.xlu0 %492, %v387
    %v494 = vpop.permute.xlu0 %493
    %497 = vset.pattern.permute.xlu0 0
    %498 = vperm.xlu0 %497, %v388
    %v499 = vpop.permute.xlu0 %498
    %502 = vset.pattern.permute.xlu0 0
    %503 = vperm.xlu0 %502, %v389
    %v504 = vpop.permute.xlu0 %503
    %507 = vset.pattern.permute.xlu0 0
    %508 = vperm.xlu0 %507, %v390
    %v509 = vpop.permute.xlu0 %508
    %512 = vset.pattern.permute.xlu0 0
    %513 = vperm.xlu0 %512, %v391
    %v514 = vpop.permute.xlu0 %513
    %517 = vset.pattern.permute.xlu0 0
    %518 = vperm.xlu0 %517, %v392
    %v519 = vpop.permute.xlu0 %518
    %522 = vset.pattern.permute.xlu0 0
    %523 = vperm.xlu0 %522, %v393
    %v524 = vpop.permute.xlu0 %523
    %527 = vset.pattern.permute.xlu0 0
    %528 = vperm.xlu0 %527, %v394
    %v529 = vpop.permute.xlu0 %528
    %532 = vset.pattern.permute.xlu0 0
    %533 = vperm.xlu0 %532, %v395
    %v534 = vpop.permute.xlu0 %533
    %537 = vset.pattern.permute.xlu0 0
    %538 = vperm.xlu0 %537, %v396
    %v539 = vpop.permute.xlu0 %538
    %542 = vset.pattern.permute.xlu0 0
    %543 = vperm.xlu0 %542, %v397
    %v544 = vpop.permute.xlu0 %543
    %547 = vset.pattern.permute.xlu0 0
    %548 = vperm.xlu0 %547, %v398
    %v549 = vpop.permute.xlu0 %548
    %552 = vset.pattern.permute.xlu0 0
    %553 = vperm.xlu0 %552, %v399
    %v554 = vpop.permute.xlu0 %553
    %557 = vset.pattern.permute.xlu0 0
    %558 = vperm.xlu0 %557, %v400
    %v559 = vpop.permute.xlu0 %558
    %v561 = vmul.f32 %v243, %v404
    %v562 = vmul.f32 %v246, %v409
    %v563 = vmul.f32 %v251, %v414
    %v564 = vmul.f32 %v254, %v419
    %v565 = vmul.f32 %v259, %v424
    %v566 = vmul.f32 %v262, %v429
    %v567 = vmul.f32 %v267, %v434
    %v568 = vmul.f32 %v270, %v439
    %v569 = vmul.f32 %v275, %v444
    %v570 = vmul.f32 %v278, %v449
    %v571 = vmul.f32 %v283, %v454
    %v572 = vmul.f32 %v286, %v459
    %v573 = vmul.f32 %v291, %v464
    %v574 = vmul.f32 %v294, %v469
    %v575 = vmul.f32 %v299, %v474
    %v576 = vmul.f32 %v302, %v479
    %v577 = vmul.f32 %v307, %v484
    %v578 = vmul.f32 %v310, %v489
    %v579 = vmul.f32 %v315, %v494
    %v580 = vmul.f32 %v318, %v499
    %v581 = vmul.f32 %v323, %v504
    %v582 = vmul.f32 %v326, %v509
    %v583 = vmul.f32 %v331, %v514
    %v584 = vmul.f32 %v334, %v519
    %v585 = vmul.f32 %v339, %v524
    %v586 = vmul.f32 %v342, %v529
    %v587 = vmul.f32 %v347, %v534
    %v588 = vmul.f32 %v350, %v539
    %v589 = vmul.f32 %v355, %v544
    %v590 = vmul.f32 %v358, %v549
    %v591 = vmul.f32 %v363, %v554
    %v592 = vmul.f32 %v366, %v559
    %v593 = vpack.c.bf16 %v562, %v561
    %v594 = vpack.c.bf16 %v564, %v563
    %v595 = vpack.c.bf16 %v566, %v565
    %v596 = vpack.c.bf16 %v568, %v567
    %v597 = vpack.c.bf16 %v570, %v569
    %v598 = vpack.c.bf16 %v572, %v571
    %v599 = vpack.c.bf16 %v574, %v573
    %v600 = vpack.c.bf16 %v576, %v575
    %v601 = vpack.c.bf16 %v578, %v577
    %v602 = vpack.c.bf16 %v580, %v579
    %v603 = vpack.c.bf16 %v582, %v581
    %v604 = vpack.c.bf16 %v584, %v583
    %v605 = vpack.c.bf16 %v586, %v585
    %v606 = vpack.c.bf16 %v588, %v587
    %v607 = vpack.c.bf16 %v590, %v589
    %v608 = vpack.c.bf16 %v592, %v591
    %v625 = vunpack.c.l.b16 %v593
    %v626 = vunpack.c.h.b16 %v593
    %v627 = vunpack.c.l.b16 %v594
    %v628 = vunpack.c.h.b16 %v594
    %v629 = vunpack.c.l.b16 %v595
    %v630 = vunpack.c.h.b16 %v595
    %v631 = vunpack.c.l.b16 %v596
    %v632 = vunpack.c.h.b16 %v596
    %v633 = vunpack.c.l.b16 %v597
    %v634 = vunpack.c.h.b16 %v597
    %v635 = vunpack.c.l.b16 %v598
    %v636 = vunpack.c.h.b16 %v598
    %v637 = vunpack.c.l.b16 %v599
    %v638 = vunpack.c.h.b16 %v599
    %v639 = vunpack.c.l.b16 %v600
    %v640 = vunpack.c.h.b16 %v600
    %v641 = vunpack.c.l.b16 %v601
    %v642 = vunpack.c.h.b16 %v601
    %v643 = vunpack.c.l.b16 %v602
    %v644 = vunpack.c.h.b16 %v602
    %v645 = vunpack.c.l.b16 %v603
    %v646 = vunpack.c.h.b16 %v603
    %v647 = vunpack.c.l.b16 %v604
    %v648 = vunpack.c.h.b16 %v604
    %v649 = vunpack.c.l.b16 %v605
    %v650 = vunpack.c.h.b16 %v605
    %v651 = vunpack.c.l.b16 %v606
    %v652 = vunpack.c.h.b16 %v606
    %v653 = vunpack.c.l.b16 %v607
    %v654 = vunpack.c.h.b16 %v607
    %v655 = vunpack.c.l.b16 %v608
    %v656 = vunpack.c.h.b16 %v608
    %v657 = vpack.c.b16 %v625, %v625
    %v658 = vpack.c.b16 %v626, %v626
    %v659 = vpack.c.b16 %v627, %v627
    %v660 = vpack.c.b16 %v628, %v628
    %v661 = vpack.c.b16 %v629, %v629
    %v662 = vpack.c.b16 %v630, %v630
    %v663 = vpack.c.b16 %v631, %v631
    %v664 = vpack.c.b16 %v632, %v632
    %v665 = vpack.c.b16 %v633, %v633
    %v666 = vpack.c.b16 %v634, %v634
    %v667 = vpack.c.b16 %v635, %v635
    %v668 = vpack.c.b16 %v636, %v636
    %v669 = vpack.c.b16 %v637, %v637
    %v670 = vpack.c.b16 %v638, %v638
    %v671 = vpack.c.b16 %v639, %v639
    %v672 = vpack.c.b16 %v640, %v640
    %v673 = vpack.c.b16 %v641, %v641
    %v674 = vpack.c.b16 %v642, %v642
    %v675 = vpack.c.b16 %v643, %v643
    %v676 = vpack.c.b16 %v644, %v644
    %v677 = vpack.c.b16 %v645, %v645
    %v678 = vpack.c.b16 %v646, %v646
    %v679 = vpack.c.b16 %v647, %v647
    %v680 = vpack.c.b16 %v648, %v648
    %v681 = vpack.c.b16 %v649, %v649
    %v682 = vpack.c.b16 %v650, %v650
    %v683 = vpack.c.b16 %v651, %v651
    %v684 = vpack.c.b16 %v652, %v652
    %v685 = vpack.c.b16 %v653, %v653
    %v686 = vpack.c.b16 %v654, %v654
    %v687 = vpack.c.b16 %v655, %v655
    %v688 = vpack.c.b16 %v656, %v656
    %721 = vst [vmem:[#allocation2] sm:$0xf] %v657
    %722 = vst [vmem:[#allocation2 + $0x4] sm:$0xf] %v658
    %723 = vst [vmem:[#allocation2 + $0x8] sm:$0xf] %v659
    %724 = vst [vmem:[#allocation2 + $0xc] sm:$0xf] %v660
    %725 = vst [vmem:[#allocation2 + $0x10] sm:$0xf] %v661
    %726 = vst [vmem:[#allocation2 + $0x14] sm:$0xf] %v662
    %727 = vst [vmem:[#allocation2 + $0x18] sm:$0xf] %v663
    %728 = vst [vmem:[#allocation2 + $0x1c] sm:$0xf] %v664
    %729 = vst [vmem:[#allocation2 + $0x20] sm:$0xf] %v665
    %730 = vst [vmem:[#allocation2 + $0x24] sm:$0xf] %v666
    %731 = vst [vmem:[#allocation2 + $0x28] sm:$0xf] %v667
    %732 = vst [vmem:[#allocation2 + $0x2c] sm:$0xf] %v668
    %733 = vst [vmem:[#allocation2 + $0x30] sm:$0xf] %v669
    %734 = vst [vmem:[#allocation2 + $0x34] sm:$0xf] %v670
    %735 = vst [vmem:[#allocation2 + $0x38] sm:$0xf] %v671
    %736 = vst [vmem:[#allocation2 + $0x3c] sm:$0xf] %v672
    %737 = vst [vmem:[#allocation2 + $0x40] sm:$0xf] %v673
    %738 = vst [vmem:[#allocation2 + $0x44] sm:$0xf] %v674
    %739 = vst [vmem:[#allocation2 + $0x48] sm:$0xf] %v675
    %740 = vst [vmem:[#allocation2 + $0x4c] sm:$0xf] %v676
    %741 = vst [vmem:[#allocation2 + $0x50] sm:$0xf] %v677
    %742 = vst [vmem:[#allocation2 + $0x54] sm:$0xf] %v678
    %743 = vst [vmem:[#allocation2 + $0x58] sm:$0xf] %v679
    %744 = vst [vmem:[#allocation2 + $0x5c] sm:$0xf] %v680
    %745 = vst [vmem:[#allocation2 + $0x60] sm:$0xf] %v681
    %746 = vst [vmem:[#allocation2 + $0x64] sm:$0xf] %v682
    %747 = vst [vmem:[#allocation2 + $0x68] sm:$0xf] %v683
    %748 = vst [vmem:[#allocation2 + $0x6c] sm:$0xf] %v684
    %749 = vst [vmem:[#allocation2 + $0x70] sm:$0xf] %v685
    %750 = vst [vmem:[#allocation2 + $0x74] sm:$0xf] %v686
    %751 = vst [vmem:[#allocation2 + $0x78] sm:$0xf] %v687
    %752 = vst [vmem:[#allocation2 + $0x7c] sm:$0xf] %v688
    // Predicated region
    $region14: #{tpu_custom_call.1} parent=1 // pred_check
      _
    $region15: #{tpu_custom_call.1} parent=1 // pred_check_branch
      %754 = sbr.rel (0) target = $region17
    $region16: #{tpu_custom_call.1} parent=1 // pred_region
      %s756 = ssub.s32 2048, 2048
      %757 = vsyncadd [#allocation3], %s756
      %s758 = sshll.u32 [#allocation2], 4
      %s759 = int_to_ptr.vmem [resolvable:$true] %s758
      %764 = dma.vmem_to_hbm [thread:$0]  %s759, 2048, %s3, [#allocation3], 64, 64, 4
    $region17: #{tpu_custom_call.1} parent=1 // pred_fallthru
      _
    // Predicated region
    $region18: #{tpu_custom_call.1} parent=1 // pred_check
      _
    $region19: #{tpu_custom_call.1} parent=1 // pred_check_branch
      %766 = sbr.rel (0) target = $region21
    $region20: #{tpu_custom_call.1} parent=1 // pred_region
      %767 = dma.done [#allocation3], 2048
    $region21: #{tpu_custom_call.1} parent=1 // pred_fallthru
      _
    %768 = vsyncpa [#allocation3], 1

</llo_original>
